<compile_context>
chip_gen: v5e
topology: v5e:2x2
jax: 0.10.0
libtpu: 0.0.40
codegen_flags: <defaults>
</compile_context>

<pallas_src>
import jax
import jax.numpy as jnp
from jax import lax
from jax.experimental import pallas as pl
from jax.experimental.pallas import tpu as pltpu


def _lr_kernel(ids_ref, w_ref, b_ref, out_ref, acc_ref):
    # ids_ref: (F, TB)  int32  — transposed id tile (lane axis = batch)
    # w_ref:   (1, TV)  f32    — weight chunk for this vocab slice
    # b_ref:   (1,)     f32    — scalar bias in SMEM
    # out_ref: (1, TB)  f32    — lane-dense sigmoid outputs for this batch tile
    # acc_ref: (1, TB)  f32    — logit accumulator, resident across vocab chunks
    k = pl.program_id(1)

    @pl.when(k == 0)
    def _init():
        acc_ref[...] = jnp.zeros_like(acc_ref)

    ids = ids_ref[...]                       # (F, TB)
    w_row = w_ref[...]                       # (1, TV)
    num_fields, tb = ids.shape
    tv = w_row.shape[1]

    # (TV, TB) vocab-index plane for this chunk; batch stays on the lane axis.
    v_iota = lax.broadcasted_iota(jnp.int32, (tv, tb), 0) + k * tv

    acc = acc_ref[...]
    for f in range(num_fields):              # static, small field count
        # one_hot_f[v, b] = (ids[f, b] == v)  — exact 0/1 floats
        one_hot_f = (ids[f:f + 1, :] == v_iota).astype(jnp.float32)       # (TV, TB)
        # (1, TV) @ (TV, TB) -> (1, TB): plain MXU matmul, field reduction on the MXU.
        acc = acc + jnp.dot(w_row, one_hot_f, preferred_element_type=jnp.float32)
    acc_ref[...] = acc

    @pl.when(k == pl.num_programs(1) - 1)
    def _finalize():
        z = acc_ref[...] + b_ref[0]                                        # scalar bias (SMEM)
        # sigmoid via tanh: exact, and the transcendental lands on the EUP slot
        # instead of a VALU divide.
        out_ref[...] = 0.5 * (jnp.tanh(0.5 * z) + 1.0)


def _round_up(x, m):
    return ((x + m - 1) // m) * m


def lr_forward(x_user, x_item, x_context, weight, bias, *,
               user_hist=None, hist_len=None, klg=None,
               block_b=1024, block_v=2048):
    """LR.forward: sigmoid(sum_f W[ids[:, f]] + b), ids = cat(x_user, x_item, x_context)."""
    del user_hist, hist_len, klg  # accepted but unused, exactly as in the PyTorch forward

    ids = jnp.concatenate([x_user, x_item, x_context], axis=1).astype(jnp.int32)
    batch, num_fields = ids.shape
    vocab = weight.size

    # Vocab chunk (reduction axis): lane-aligned; bounds the (TV, TB) one-hot footprint.
    tv = min(_round_up(vocab, 128), _round_up(block_v, 128))
    v_pad = _round_up(vocab, tv)

    # Batch tile: lane-aligned, and guarantee >= 2 tiles whenever batch allows so the
    # "parallel" axis actually feeds both TensorCores on v7x (no cost on v5e/v6e).
    b_pad_min = _round_up(batch, 128)
    tb = max(128, min(_round_up(block_b, 128), _round_up(pl.cdiv(b_pad_min, 2), 128)))
    b_pad = _round_up(batch, tb)

    # (F, B) transposed id layout: each field is a lane-dense row (review item #1).
    ids_t = jnp.transpose(ids)
    if b_pad != batch:
        ids_t = jnp.pad(ids_t, ((0, 0), (0, b_pad - batch)))  # padded ids hit vocab slot 0; sliced off below

    w_row = jnp.reshape(weight, (1, vocab)).astype(jnp.float32)
    if v_pad != vocab:
        w_row = jnp.pad(w_row, ((0, 0), (0, v_pad - vocab)))   # padded vocab never matches a real id
    b_smem = jnp.reshape(bias, (1,)).astype(jnp.float32)       # 1-D SMEM scalar (no 2-D padding)

    grid = (b_pad // tb, v_pad // tv)

    out = pl.pallas_call(
        _lr_kernel,
        out_shape=jax.ShapeDtypeStruct((1, b_pad), jnp.float32),
        grid=grid,
        in_specs=[
            pl.BlockSpec((num_fields, tb), lambda i, k: (0, i)),     # transposed id tile per batch step
            pl.BlockSpec((1, tv), lambda i, k: (0, k)),              # weight chunk per vocab step
            pl.BlockSpec(memory_space=pltpu.MemorySpace.SMEM),       # scalar bias on the sreg path
        ],
        out_specs=pl.BlockSpec((1, tb), lambda i, k: (0, i)),        # lane-dense output row, resident over k
        scratch_shapes=[pltpu.VMEM((1, tb), jnp.float32)],           # logit accumulator
        compiler_params=pltpu.CompilerParams(
            dimension_semantics=("parallel", "arbitrary"),           # batch tiles parallel, vocab chunks reduce
        ),
    )(ids_t, w_row, b_smem)

    return out[0, :batch]  # glue: drop batch padding; matches torch .squeeze(1)


if __name__ == "__main__":
    # Small config consistent with the Rec/LR constructor.
    vocabulary_size = 512
    user_num_fields, item_num_fields, context_num_fields = 2, 2, 1
    batch = 200  # deliberately NOT a multiple of the tile, to exercise remainder padding

    key = jax.random.PRNGKey(0)
    k_u, k_i, k_c, k_w, k_b = jax.random.split(key, 5)

    x_user = jax.random.randint(k_u, (batch, user_num_fields), 0, vocabulary_size, jnp.int32)
    x_item = jax.random.randint(k_i, (batch, item_num_fields), 0, vocabulary_size, jnp.int32)
    x_context = jax.random.randint(k_c, (batch, context_num_fields), 0, vocabulary_size, jnp.int32)

    # Linear(vocabulary_size): embedding weight (V, 1) + scalar bias, deterministic init.
    weight = 0.05 * jax.random.normal(k_w, (vocabulary_size, 1), jnp.float32)
    bias = 0.05 * jax.random.normal(k_b, (1,), jnp.float32)

    # Forward inputs accepted but unused by LR (kept for signature fidelity).
    user_hist = jnp.zeros((batch, 4), jnp.int32)
    hist_len = jnp.ones((batch,), jnp.int32)
    klg = jnp.zeros((batch, 8), jnp.float32)

    # block_b=128 / block_v=256 -> grid (2, 2): exercises both the megacore-parallel
    # batch axis and the vocab-chunk reduction (accumulator init/finalize) path.
    out = lr_forward(x_user, x_item, x_context, weight, bias,
                     user_hist=user_hist, hist_len=hist_len, klg=klg,
                     block_b=128, block_v=256)
    out = jax.block_until_ready(out)

    # Plain-JAX reference of the same math.
    ids = jnp.concatenate([x_user, x_item, x_context], axis=1)
    logits = jnp.take(weight[:, 0], ids).sum(axis=1) + bias[0]
    ref = jax.nn.sigmoid(logits)

    assert out.shape == (batch,)
    assert jnp.allclose(out, ref, atol=5e-5, rtol=5e-5), float(jnp.max(jnp.abs(out - ref)))
    print("KERNEL_OK")
</pallas_src>

<mosaic_0001>
module attributes {stable_mosaic.version = 11 : i64} {
  func.func @_lr_kernel(%arg0: i32, %arg1: i32, %arg2: memref<5x128xi32, #tpu.memory_space<vmem>>, %arg3: memref<1x256xf32, #tpu.memory_space<vmem>>, %arg4: memref<1xf32, #tpu.memory_space<smem>>, %arg5: memref<1x128xf32, #tpu.memory_space<vmem>>, %arg6: memref<1x128xf32, #tpu.memory_space<vmem>>) attributes {dimension_semantics = [#tpu.dimension_semantics<parallel>, #tpu.dimension_semantics<arbitrary>], iteration_bounds = array<i64: 2, 2>, scalar_prefetch = 0 : i64, scratch_operands = 1 : i64, tpu.core_type = #tpu.core_type<tc>, window_params = [{transform_indices = @transform_0, window_bounds = array<i64: 5, 128>}, {transform_indices = @transform_1, window_bounds = array<i64: 1, 256>}, {transform_indices = @transform_2, window_bounds = array<i64: 1>}, {transform_indices = @transform_3, window_bounds = array<i64: 1, 128>}]} {
    %c0_i32 = arith.constant 0 : i32
    %0 = arith.cmpi eq, %arg1, %c0_i32 : i32
    %1 = arith.extui %0 : i1 to i32
    %c0_i32_0 = arith.constant 0 : i32
    %2 = arith.cmpi ne, %1, %c0_i32_0 : i32
    scf.if %2 {
      %cst_13 = arith.constant 0.000000e+00 : f32
      %49 = vector.broadcast %cst_13 : f32 to vector<1x128xf32>
      %c0_14 = arith.constant 0 : index
      %c0_15 = arith.constant 0 : index
      %50 = vector.load %arg6[%c0_14, %c0_15] : memref<1x128xf32, #tpu.memory_space<vmem>>, vector<1x128xf32>
      tpu.vector_store %arg6[%c0_14, %c0_15], %49 {strides = array<i32>} : memref<1x128xf32, #tpu.memory_space<vmem>>, vector<1x128xf32>,
    } else {
    }
    %c0 = arith.constant 0 : index
    %c0_1 = arith.constant 0 : index
    %3 = vector.load %arg2[%c0, %c0_1] : memref<5x128xi32, #tpu.memory_space<vmem>>, vector<5x128xi32>
    %c0_2 = arith.constant 0 : index
    %c0_3 = arith.constant 0 : index
    %4 = vector.load %arg3[%c0_2, %c0_3] : memref<1x256xf32, #tpu.memory_space<vmem>>, vector<1x256xf32>
    %5 = tpu.iota {dimensions = array<i32: 0>} : vector<256x128xi32>
    %c256_i32 = arith.constant 256 : i32
    %6 = arith.muli %arg1, %c256_i32 : i32
    %7 = vector.broadcast %6 : i32 to vector<256x128xi32>
    %8 = arith.addi %5, %7 : vector<256x128xi32>
    %c0_4 = arith.constant 0 : index
    %c0_5 = arith.constant 0 : index
    %9 = vector.load %arg6[%c0_4, %c0_5] : memref<1x128xf32, #tpu.memory_space<vmem>>, vector<1x128xf32>
    %10 = vector.extract_strided_slice %3 {offsets = [0, 0], sizes = [1, 128], strides = [1, 1]} : vector<5x128xi32> to vector<1x128xi32>
    %11 = vector.broadcast %10 : vector<1x128xi32> to vector<256x128xi32>
    %12 = arith.cmpi eq, %11, %8 : vector<256x128xi32>
    %13 = arith.extui %12 : vector<256x128xi1> to vector<256x128xi32>
    %14 = arith.sitofp %13 : vector<256x128xi32> to vector<256x128xf32>
    %cst = arith.constant dense<0.000000e+00> : vector<1x128xf32>
    %15 = tpu.matmul %4, %14, %cst {dimension_numbers = #tpu.dot_dimension_numbers<[1], [0], [0], [1], [0, 0, 1, 1], [], []>} : vector<1x256xf32>, vector<256x128xf32>, vector<1x128xf32> -> vector<1x128xf32>
    %16 = arith.addf %9, %15 : vector<1x128xf32>
    %17 = vector.extract_strided_slice %3 {offsets = [1, 0], sizes = [1, 128], strides = [1, 1]} : vector<5x128xi32> to vector<1x128xi32>
    %18 = vector.broadcast %17 : vector<1x128xi32> to vector<256x128xi32>
    %19 = arith.cmpi eq, %18, %8 : vector<256x128xi32>
    %20 = arith.extui %19 : vector<256x128xi1> to vector<256x128xi32>
    %21 = arith.sitofp %20 : vector<256x128xi32> to vector<256x128xf32>
    %cst_6 = arith.constant dense<0.000000e+00> : vector<1x128xf32>
    %22 = tpu.matmul %4, %21, %cst_6 {dimension_numbers = #tpu.dot_dimension_numbers<[1], [0], [0], [1], [0, 0, 1, 1], [], []>} : vector<1x256xf32>, vector<256x128xf32>, vector<1x128xf32> -> vector<1x128xf32>
    %23 = arith.addf %16, %22 : vector<1x128xf32>
    %24 = vector.extract_strided_slice %3 {offsets = [2, 0], sizes = [1, 128], strides = [1, 1]} : vector<5x128xi32> to vector<1x128xi32>
    %25 = vector.broadcast %24 : vector<1x128xi32> to vector<256x128xi32>
    %26 = arith.cmpi eq, %25, %8 : vector<256x128xi32>
    %27 = arith.extui %26 : vector<256x128xi1> to vector<256x128xi32>
    %28 = arith.sitofp %27 : vector<256x128xi32> to vector<256x128xf32>
    %cst_7 = arith.constant dense<0.000000e+00> : vector<1x128xf32>
    %29 = tpu.matmul %4, %28, %cst_7 {dimension_numbers = #tpu.dot_dimension_numbers<[1], [0], [0], [1], [0, 0, 1, 1], [], []>} : vector<1x256xf32>, vector<256x128xf32>, vector<1x128xf32> -> vector<1x128xf32>
    %30 = arith.addf %23, %29 : vector<1x128xf32>
    %31 = vector.extract_strided_slice %3 {offsets = [3, 0], sizes = [1, 128], strides = [1, 1]} : vector<5x128xi32> to vector<1x128xi32>
    %32 = vector.broadcast %31 : vector<1x128xi32> to vector<256x128xi32>
    %33 = arith.cmpi eq, %32, %8 : vector<256x128xi32>
    %34 = arith.extui %33 : vector<256x128xi1> to vector<256x128xi32>
    %35 = arith.sitofp %34 : vector<256x128xi32> to vector<256x128xf32>
    %cst_8 = arith.constant dense<0.000000e+00> : vector<1x128xf32>
    %36 = tpu.matmul %4, %35, %cst_8 {dimension_numbers = #tpu.dot_dimension_numbers<[1], [0], [0], [1], [0, 0, 1, 1], [], []>} : vector<1x256xf32>, vector<256x128xf32>, vector<1x128xf32> -> vector<1x128xf32>
    %37 = arith.addf %30, %36 : vector<1x128xf32>
    %38 = vector.extract_strided_slice %3 {offsets = [4, 0], sizes = [1, 128], strides = [1, 1]} : vector<5x128xi32> to vector<1x128xi32>
    %39 = vector.broadcast %38 : vector<1x128xi32> to vector<256x128xi32>
    %40 = arith.cmpi eq, %39, %8 : vector<256x128xi32>
    %41 = arith.extui %40 : vector<256x128xi1> to vector<256x128xi32>
    %42 = arith.sitofp %41 : vector<256x128xi32> to vector<256x128xf32>
    %cst_9 = arith.constant dense<0.000000e+00> : vector<1x128xf32>
    %43 = tpu.matmul %4, %42, %cst_9 {dimension_numbers = #tpu.dot_dimension_numbers<[1], [0], [0], [1], [0, 0, 1, 1], [], []>} : vector<1x256xf32>, vector<256x128xf32>, vector<1x128xf32> -> vector<1x128xf32>
    %44 = arith.addf %37, %43 : vector<1x128xf32>
    %c0_10 = arith.constant 0 : index
    %c0_11 = arith.constant 0 : index
    %45 = vector.load %arg6[%c0_10, %c0_11] : memref<1x128xf32, #tpu.memory_space<vmem>>, vector<1x128xf32>
    tpu.vector_store %arg6[%c0_10, %c0_11], %44 {strides = array<i32>} : memref<1x128xf32, #tpu.memory_space<vmem>>, vector<1x128xf32>,
    %c1_i32 = arith.constant 1 : i32
    %46 = arith.cmpi eq, %arg1, %c1_i32 : i32
    %47 = arith.extui %46 : i1 to i32
    %c0_i32_12 = arith.constant 0 : i32
    %48 = arith.cmpi ne, %47, %c0_i32_12 : i32
    scf.if %48 {
      %c0_13 = arith.constant 0 : index
      %c0_14 = arith.constant 0 : index
      %49 = vector.load %arg6[%c0_13, %c0_14] : memref<1x128xf32, #tpu.memory_space<vmem>>, vector<1x128xf32>
      %c0_15 = arith.constant 0 : index
      %50 = memref.load %arg4[%c0_15] : memref<1xf32, #tpu.memory_space<smem>>
      %51 = vector.broadcast %50 : f32 to vector<1x128xf32>
      %52 = arith.addf %49, %51 : vector<1x128xf32>
      %cst_16 = arith.constant 5.000000e-01 : f32
      %53 = vector.broadcast %cst_16 : f32 to vector<1x128xf32>
      %54 = arith.mulf %53, %52 : vector<1x128xf32>
      %55 = math.tanh %54 : vector<1x128xf32>
      %cst_17 = arith.constant 1.000000e+00 : f32
      %56 = vector.broadcast %cst_17 : f32 to vector<1x128xf32>
      %57 = arith.addf %55, %56 : vector<1x128xf32>
      %cst_18 = arith.constant 5.000000e-01 : f32
      %58 = vector.broadcast %cst_18 : f32 to vector<1x128xf32>
      %59 = arith.mulf %58, %57 : vector<1x128xf32>
      %c0_19 = arith.constant 0 : index
      %c0_20 = arith.constant 0 : index
      %60 = vector.load %arg5[%c0_19, %c0_20] : memref<1x128xf32, #tpu.memory_space<vmem>>, vector<1x128xf32>
      tpu.vector_store %arg5[%c0_19, %c0_20], %59 {strides = array<i32>} : memref<1x128xf32, #tpu.memory_space<vmem>>, vector<1x128xf32>,
    } else {
    }
    return
  }
  func.func @transform_0(%arg0: i32, %arg1: i32) -> (i32, i32) {
    %c0_i32 = arith.constant 0 : i32
    %c0_i32_0 = arith.constant 0 : i32
    return %c0_i32, %arg0 : i32, i32
  }
  func.func @transform_1(%arg0: i32, %arg1: i32) -> (i32, i32) {
    %c0_i32 = arith.constant 0 : i32
    %c0_i32_0 = arith.constant 0 : i32
    return %c0_i32, %arg1 : i32, i32
  }
  func.func @transform_2(%arg0: i32, %arg1: i32) -> i32 {
    %c0_i32 = arith.constant 0 : i32
    %c0_i32_0 = arith.constant 0 : i32
    return %c0_i32 : i32
  }
  func.func @transform_3(%arg0: i32, %arg1: i32) -> (i32, i32) {
    %c0_i32 = arith.constant 0 : i32
    %c0_i32_0 = arith.constant 0 : i32
    return %c0_i32, %arg0 : i32, i32
  }
}

</mosaic_0001>

<llo_original>
// kernel: tpu_custom_call.1
$region0: #{tpu_custom_call.1}
  #allocation0 [shape = 'u32[]', space=smem, size = 0x4, offset = 0x4, fixed_abs, tag = 'smem constant byte address 0x4 - core index']
  #allocation1 [shape = 'u32[72,128]{1,0:T(1,128)}', space=vmem, size = 0x9000, scoped, tag = 'internal scratch']
  #allocation2 [shape = 'f32[1,128]{1,0:T(1,128)}', space=vmem, size = 0x200, scoped, tag = 'scratch operand']
  #allocation3 [shape = 'f32[1]{0:T(128)S(6)}', space=smem, size = 0x200, scoped, tag = 'scoped memory for tpu_custom_call.1']
  %s0 = inlined_call_operand.hbm [shape: s32[5,256], index: 0, kind: input, shape index: {}]
  %s1 = inlined_call_operand.hbm [shape: f32[1,512], index: 1, kind: input, shape index: {}]
  %s2 = inlined_call_operand.<no memory space> [shape: f32[1], index: 2, kind: input, shape index: {}]
  %s3 = inlined_call_operand.hbm [shape: f32[1,256], index: 3, kind: output, shape index: {}]
  %s4 = sld [smem:[#allocation0]]
  $region61: #{tpu_custom_call.1} parent=0
    _
  %s6 = ssub.s32 1, %s4
  %s7 = scalar_select 0, %s6, %s4
  %8 = sst [smem:[#allocation3]] %s2
  $region1: #{tpu_custom_call.1} parent=0
    #allocation4 [shape = 'u8[8192]{0}', space=vmem, size = 0x2000, scoped, tag = 'input window, operand 0']
    #allocation5 [shape = 's32[2]{0}', space=sflag, size = 0x8, scoped, tag = 'scoped memory for tpu_custom_call.1']
    #allocation6 [shape = 's32[2]{0}', space=sflag, size = 0x8, scoped, tag = 'scoped memory for tpu_custom_call.1']
    #allocation7 [shape = 'u8[2048]{0}', space=vmem, size = 0x800, scoped, tag = 'input window, operand 1']
    #allocation8 [shape = 's32[2]{0}', space=sflag, size = 0x8, scoped, tag = 'scoped memory for tpu_custom_call.1']
    #allocation9 [shape = 'u8[1024]{0}', space=vmem, size = 0x400, scoped, tag = 'output window, operand 0']
    %9 = vsyncpa [#allocation5], 0
    %s10 = scalar_lea.sflag [#allocation5], 1
    %11 = vsyncpa %s10, 0
    %12 = vsyncpa [#allocation8], 0
    %s13 = scalar_lea.sflag [#allocation8], 1
    %14 = vsyncpa %s13, 0
    %15 = vsyncpa [#allocation6], 0
    %s16 = scalar_lea.sflag [#allocation6], 1
    %17 = vsyncpa %s16, 0
    loop: start=0, step=1, limit=6
    $region2: #{tpu_custom_call.1} parent=1 // loop_pre_header
      _
    $region3: #{tpu_custom_call.1} parent=1 // loop_header
      %s19 = sphi 0, %s23
      %p20 = scmp.ge.s32.totalorder %s19, 6
      %s26 = sphi 0, %s38
      %s27 = sphi 0, %s34
      %s28 = sphi 0, %s26
      %s29 = sphi 0, %s27
      %s30 = sphi 0, %s28
      %s31 = sphi 0, %s29
      %s41 = sphi 0, %s43
      %s44 = sphi 0, %s41
      %s45 = sphi 0, %s44
      %s61 = sphi 0, %s45
      %s67 = sphi 0, %s69
      %s70 = sphi 0, %s67
      %s71 = sphi 0, %s70
      %s87 = sphi 0, %s71
      %s91 = sphi 0, %s91
      %s93 = sphi 0, %s91
      %s94 = sphi 0, %s93
      %s108 = sphi 0, %s94
      %s114 = sphi 0, %s116
      %s117 = sphi 0, %s114
      %s118 = sphi 0, %s117
      %s134 = sphi 0, %s118
    $region4: #{tpu_custom_call.1} parent=1 // loop_header_branch
      %22 = sbr.rel (%p20) target = $region8
    $region5: #{tpu_custom_call.1} parent=1 // loop_body
      %s24 = ssub.s32 %s19, 1
      %s25 = ssub.s32 %s19, 2
      %s32 = sadd.s32 1, %s27
      %p33 = scmp.ge.s32.totalorder %s32, 2
      %s34 = scalar_select %p33, 0, %s32
      %s35 = sadd.s32 1, %s26
      %s36 = scalar_select %p33, %s35, %s26
      %p37 = scmp.ge.s32.totalorder %s36, 2
      %s38 = scalar_select %p37, 0, %s36
      %s39 = ssub.s32 %s26, %s38
      %p40 = scmp.eq.s32.totalorder %s39, 0
      %s42 = sadd.s32 %s41, 1
      %s43 = scalar_select %p40, %s41, %s42
      %p46 = pneg %p40
      %p47 = scmp.eq.s32.totalorder %s19, 3
      %p48 = por %p46, %p47
      %p49 = scmp.ne.s32.totalorder %s41, %s44
      %p50 = scmp.eq.s32.totalorder %s19, 0
      %p51 = por %p49, %p50
      %p52 = scmp.ne.s32.totalorder %s41, %s44
      %p53 = scmp.eq.s32.totalorder %s24, 3
      %p54 = por %p52, %p53
      %p55 = scmp.ne.s32.totalorder %s44, %s45
      %p56 = scmp.eq.s32.totalorder %s24, 0
      %p57 = por %p55, %p56
      %p58 = scmp.ne.s32.totalorder %s44, %s45
      %p59 = scmp.eq.s32.totalorder %s25, 3
      %p60 = por %p58, %p59
      %p62 = scmp.ne.s32.totalorder %s45, %s61
      %p63 = scmp.eq.s32.totalorder %s25, 0
      %p64 = por %p62, %p63
      %s65 = ssub.s32 %s27, %s34
      %p66 = scmp.eq.s32.totalorder %s65, 0
      %s68 = sadd.s32 %s67, 1
      %s69 = scalar_select %p66, %s67, %s68
      %p72 = pneg %p66
      %p73 = scmp.eq.s32.totalorder %s19, 3
      %p74 = por %p72, %p73
      %p75 = scmp.ne.s32.totalorder %s67, %s70
      %p76 = scmp.eq.s32.totalorder %s19, 0
      %p77 = por %p75, %p76
      %p78 = scmp.ne.s32.totalorder %s67, %s70
      %p79 = scmp.eq.s32.totalorder %s24, 3
      %p80 = por %p78, %p79
      %p81 = scmp.ne.s32.totalorder %s70, %s71
      %p82 = scmp.eq.s32.totalorder %s24, 0
      %p83 = por %p81, %p82
      %p84 = scmp.ne.s32.totalorder %s70, %s71
      %p85 = scmp.eq.s32.totalorder %s25, 3
      %p86 = por %p84, %p85
      %p88 = scmp.ne.s32.totalorder %s71, %s87
      %p89 = scmp.eq.s32.totalorder %s25, 0
      %p90 = por %p88, %p89
      %s92 = sadd.s32 %s91, 1
      %p95 = scmp.eq.s32.totalorder %s19, 3
      %p96 = scmp.ne.s32.totalorder %s91, %s93
      %p97 = scmp.eq.s32.totalorder %s19, 0
      %p98 = por %p96, %p97
      %p99 = scmp.ne.s32.totalorder %s91, %s93
      %p100 = scmp.eq.s32.totalorder %s24, 3
      %p101 = por %p99, %p100
      %p102 = scmp.ne.s32.totalorder %s93, %s94
      %p103 = scmp.eq.s32.totalorder %s24, 0
      %p104 = por %p102, %p103
      %p105 = scmp.ne.s32.totalorder %s93, %s94
      %p106 = scmp.eq.s32.totalorder %s25, 3
      %p107 = por %p105, %p106
      %p109 = scmp.ne.s32.totalorder %s94, %s108
      %p110 = scmp.eq.s32.totalorder %s25, 0
      %p111 = por %p109, %p110
      %s112 = ssub.s32 %s26, %s38
      %p113 = scmp.eq.s32.totalorder %s112, 0
      %s115 = sadd.s32 %s114, 1
      %s116 = scalar_select %p113, %s114, %s115
      %p119 = pneg %p113
      %p120 = scmp.eq.s32.totalorder %s19, 3
      %p121 = por %p119, %p120
      %p122 = scmp.ne.s32.totalorder %s114, %s117
      %p123 = scmp.eq.s32.totalorder %s19, 0
      %p124 = por %p122, %p123
      %p125 = scmp.ne.s32.totalorder %s114, %s117
      %p126 = scmp.eq.s32.totalorder %s24, 3
      %p127 = por %p125, %p126
      %p128 = scmp.ne.s32.totalorder %s117, %s118
      %p129 = scmp.eq.s32.totalorder %s24, 0
      %p130 = por %p128, %p129
      %p131 = scmp.ne.s32.totalorder %s117, %s118
      %p132 = scmp.eq.s32.totalorder %s25, 3
      %p133 = por %p131, %p132
      %p135 = scmp.ne.s32.totalorder %s118, %s134
      %p136 = scmp.eq.s32.totalorder %s25, 0
      %p137 = por %p135, %p136
      %p138 = scmp.le.s32.totalorder 1, %s19
      %p139 = scmp.lt.s32.totalorder %s19, 5
      %p140 = pnand %p138, %p139
      %p141 = pneg %p140
      // Predicated region
      $region9: #{tpu_custom_call.1} parent=5 // pred_check
        _
      $region10: #{tpu_custom_call.1} parent=5 // pred_check_branch
        %143 = sbr.rel (%p140) target = $region12
      $region11: #{tpu_custom_call.1} parent=5 // pred_region
        %s144 = ssub.s32 %s19, 1
        // Predicated region
        $region13: #{tpu_custom_call.1} parent=11 // pred_check
          %p145 = pneg %p104
        $region14: #{tpu_custom_call.1} parent=11 // pred_check_branch
          %147 = sbr.rel (%p145) target = $region16
        $region15: #{tpu_custom_call.1} parent=11 // pred_region
          _
        $region16: #{tpu_custom_call.1} parent=11 // pred_fallthru
          _
      $region12: #{tpu_custom_call.1} parent=5 // pred_fallthru
        _
      %p148 = scmp.lt.s32.totalorder %s19, 4
      // Predicated region
      $region17: #{tpu_custom_call.1} parent=5 // pred_check
        %p149 = pneg %p148
      $region18: #{tpu_custom_call.1} parent=5 // pred_check_branch
        %151 = sbr.rel (%p149) target = $region20
      $region19: #{tpu_custom_call.1} parent=5 // pred_region
        // Predicated region
        $region21: #{tpu_custom_call.1} parent=19 // pred_check
          %p152 = pneg %p51
        $region22: #{tpu_custom_call.1} parent=19 // pred_check_branch
          %154 = sbr.rel (%p152) target = $region24
        $region23: #{tpu_custom_call.1} parent=19 // pred_region
          %s155 = sand.u32 %s41, 1
          %s156 = scalar_lea.sflag [#allocation5], %s155
          %s157 = sand.u32 %s41, 1
          %s158 = smul.addr %s157, 8
          %s159 = scalar_lea.vmem [#allocation4], %s158
          %161 = vsyncadd %s156, 0
          %s162 = smul.addr %s26, 8
          %s163 = scalar_lea.hbm %s0, %s162
          %s165 = sshll.u32 %s163, 4
          %s166 = int_to_ptr.hbm [resolvable:$true] %s165
          %s167 = sshll.u32 %s159, 4
          %s168 = int_to_ptr.vmem [resolvable:$true] %s167
          %170 = dma.hbm_to_vmem [thread:$0]  %s166, 128, %s168, %s156
        $region24: #{tpu_custom_call.1} parent=19 // pred_fallthru
          _
        // Predicated region
        $region25: #{tpu_custom_call.1} parent=19 // pred_check
          %p171 = pneg %p77
        $region26: #{tpu_custom_call.1} parent=19 // pred_check_branch
          %173 = sbr.rel (%p171) target = $region28
        $region27: #{tpu_custom_call.1} parent=19 // pred_region
          %s174 = sand.u32 %s67, 1
          %s175 = scalar_lea.sflag [#allocation8], %s174
          %s176 = sand.u32 %s67, 1
          %s177 = smul.addr %s176, 2
          %s178 = scalar_lea.vmem [#allocation7], %s177
          %s179 = smul.u32 2, %s27
          %181 = vsyncadd %s175, 0
          %s182 = scalar_lea.hbm %s1, %s179
          %s184 = sshll.u32 %s182, 4
          %s185 = int_to_ptr.hbm [resolvable:$true] %s184
          %s186 = sshll.u32 %s178, 4
          %s187 = int_to_ptr.vmem [resolvable:$true] %s186
          %189 = dma.hbm_to_vmem [thread:$0]  %s185, 32, %s187, %s175
        $region28: #{tpu_custom_call.1} parent=19 // pred_fallthru
          _
      $region20: #{tpu_custom_call.1} parent=5 // pred_fallthru
        _
      %p190 = scmp.le.s32.totalorder 1, %s19
      %p191 = scmp.lt.s32.totalorder %s19, 5
      %p192 = pnand %p190, %p191
      %p193 = pneg %p192
      // Predicated region
      $region29: #{tpu_custom_call.1} parent=5 // pred_check
        _
      $region30: #{tpu_custom_call.1} parent=5 // pred_check_branch
        %195 = sbr.rel (%p192) target = $region32
      $region31: #{tpu_custom_call.1} parent=5 // pred_region
        %s196 = ssub.s32 %s19, 1
        %s197 = sand.u32 %s44, 1
        %s198 = scalar_lea.sflag [#allocation5], %s197
        %s199 = sand.u32 %s44, 1
        %s200 = smul.addr %s199, 8
        %s201 = scalar_lea.vmem [#allocation4], %s200
        // Predicated region
        $region33: #{tpu_custom_call.1} parent=31 // pred_check
          %p202 = pneg %p57
        $region34: #{tpu_custom_call.1} parent=31 // pred_check_branch
          %204 = sbr.rel (%p202) target = $region36
        $region35: #{tpu_custom_call.1} parent=31 // pred_region
          %206 = dma.done %s198, 128
        $region36: #{tpu_custom_call.1} parent=31 // pred_fallthru
          _
        %s207 = sand.u32 %s70, 1
        %s208 = scalar_lea.sflag [#allocation8], %s207
        %s209 = sand.u32 %s70, 1
        %s210 = smul.addr %s209, 2
        %s211 = scalar_lea.vmem [#allocation7], %s210
        // Predicated region
        $region37: #{tpu_custom_call.1} parent=31 // pred_check
          %p212 = pneg %p83
        $region38: #{tpu_custom_call.1} parent=31 // pred_check_branch
          %214 = sbr.rel (%p212) target = $region40
        $region39: #{tpu_custom_call.1} parent=31 // pred_region
          %216 = dma.done %s208, 32
        $region40: #{tpu_custom_call.1} parent=31 // pred_fallthru
          _
        %s217 = sand.u32 %s44, 1
        %s218 = scalar_lea.sflag [#allocation5], %s217
        %s219 = sand.u32 %s44, 1
        %s220 = smul.addr %s219, 8
        %s221 = scalar_lea.vmem [#allocation4], %s220
        %p222 = pneg %p57
        %p223 = pneg %p54
        %s224 = sand.u32 %s70, 1
        %s225 = scalar_lea.sflag [#allocation8], %s224
        %s226 = sand.u32 %s70, 1
        %s227 = smul.addr %s226, 2
        %s228 = scalar_lea.vmem [#allocation7], %s227
        %p229 = pneg %p83
        %p230 = pneg %p80
        %p231 = pneg %p104
        %p232 = pneg %p101
        %p233 = pneg %p130
        %p234 = pneg %p127
        %s235 = sand.u32 %s117, 1
        %s236 = scalar_lea.sflag [#allocation6], %s235
        %s237 = sand.u32 %s117, 1
        %s238 = scalar_lea.vmem [#allocation9], %s237
        %s239 = smul.u32 2, %s29
        %p240 = scmp.eq.s32.totalorder %s29, 0
        // Predicated region
        $region41: #{tpu_custom_call.1} parent=31 // pred_check
          %p241 = pneg %p240
        $region42: #{tpu_custom_call.1} parent=31 // pred_check_branch
          %243 = sbr.rel (%p241) target = $region44
        $region43: #{tpu_custom_call.1} parent=31 // pred_region
          %244 = vst [vmem:[#allocation2] sm:$0x1] 0.0
        $region44: #{tpu_custom_call.1} parent=31 // pred_fallthru
          _
        %v245 = vld [vmem:[%s201] sm:$0x1f]
        %v246 = vld [vmem:[%s211] sm:$0x3]
        %v247 = vlaneseq
        %v248 = vshrl.u32 %v247, 7
        %v249 = vadd.s32 %v248, 8
        %v250 = vadd.s32 %v248, 16
        %v251 = vadd.s32 %v248, 24
        %v252 = vadd.s32 %v248, 32
        %v253 = vadd.s32 %v248, 40
        %v254 = vadd.s32 %v248, 48
        %v255 = vadd.s32 %v248, 56
        %v256 = vadd.s32 %v248, 64
        %v257 = vadd.s32 %v248, 72
        %v258 = vadd.s32 %v248, 80
        %v259 = vadd.s32 %v248, 88
        %v260 = vadd.s32 %v248, 96
        %v261 = vadd.s32 %v248, 104
        %v262 = vadd.s32 %v248, 112
        %v263 = vadd.s32 %v248, 120
        %v264 = vadd.s32 %v248, 128
        %v265 = vadd.s32 %v248, 136
        %v266 = vadd.s32 %v248, 144
        %v267 = vadd.s32 %v248, 152
        %v268 = vadd.s32 %v248, 160
        %v269 = vadd.s32 %v248, 168
        %v270 = vadd.s32 %v248, 176
        %v271 = vadd.s32 %v248, 184
        %v272 = vadd.s32 %v248, 192
        %v273 = vadd.s32 %v248, 200
        %v274 = vadd.s32 %v248, 208
        %v275 = vadd.s32 %v248, 216
        %v276 = vadd.s32 %v248, 224
        %v277 = vadd.s32 %v248, 232
        %v278 = vadd.s32 %v248, 240
        %v279 = vadd.s32 %v248, 248
        %s280 = smul.u32 %s29, 256
        %v281 = vstv %s280
        %v282 = vadd.s32 %v248, %v281
        %v283 = vadd.s32 %v249, %v281
        %v284 = vadd.s32 %v250, %v281
        %v285 = vadd.s32 %v251, %v281
        %v286 = vadd.s32 %v252, %v281
        %v287 = vadd.s32 %v253, %v281
        %v288 = vadd.s32 %v254, %v281
        %v289 = vadd.s32 %v255, %v281
        %v290 = vadd.s32 %v256, %v281
        %v291 = vadd.s32 %v257, %v281
        %v292 = vadd.s32 %v258, %v281
        %v293 = vadd.s32 %v259, %v281
        %v294 = vadd.s32 %v260, %v281
        %v295 = vadd.s32 %v261, %v281
        %v296 = vadd.s32 %v262, %v281
        %v297 = vadd.s32 %v263, %v281
        %v298 = vadd.s32 %v264, %v281
        %v299 = vadd.s32 %v265, %v281
        %v300 = vadd.s32 %v266, %v281
        %v301 = vadd.s32 %v267, %v281
        %v302 = vadd.s32 %v268, %v281
        %v303 = vadd.s32 %v269, %v281
        %v304 = vadd.s32 %v270, %v281
        %v305 = vadd.s32 %v271, %v281
        %v306 = vadd.s32 %v272, %v281
        %v307 = vadd.s32 %v273, %v281
        %v308 = vadd.s32 %v274, %v281
        %v309 = vadd.s32 %v275, %v281
        %v310 = vadd.s32 %v276, %v281
        %v311 = vadd.s32 %v277, %v281
        %v312 = vadd.s32 %v278, %v281
        %v313 = vadd.s32 %v279, %v281
        %v314 = vld [vmem:[#allocation2] sm:$0x1]
        %v315 = vperm.slane %v245, 0
        %vm316 = vcmp.eq.s32.totalorder %v315, %v282
        %vm317 = vcmp.eq.s32.totalorder %v315, %v283
        %vm318 = vcmp.eq.s32.totalorder %v315, %v284
        %vm319 = vcmp.eq.s32.totalorder %v315, %v285
        %vm320 = vcmp.eq.s32.totalorder %v315, %v286
        %vm321 = vcmp.eq.s32.totalorder %v315, %v287
        %vm322 = vcmp.eq.s32.totalorder %v315, %v288
        %vm323 = vcmp.eq.s32.totalorder %v315, %v289
        %vm324 = vcmp.eq.s32.totalorder %v315, %v290
        %vm325 = vcmp.eq.s32.totalorder %v315, %v291
        %vm326 = vcmp.eq.s32.totalorder %v315, %v292
        %vm327 = vcmp.eq.s32.totalorder %v315, %v293
        %vm328 = vcmp.eq.s32.totalorder %v315, %v294
        %vm329 = vcmp.eq.s32.totalorder %v315, %v295
        %vm330 = vcmp.eq.s32.totalorder %v315, %v296
        %vm331 = vcmp.eq.s32.totalorder %v315, %v297
        %vm332 = vcmp.eq.s32.totalorder %v315, %v298
        %vm333 = vcmp.eq.s32.totalorder %v315, %v299
        %vm334 = vcmp.eq.s32.totalorder %v315, %v300
        %vm335 = vcmp.eq.s32.totalorder %v315, %v301
        %vm336 = vcmp.eq.s32.totalorder %v315, %v302
        %vm337 = vcmp.eq.s32.totalorder %v315, %v303
        %vm338 = vcmp.eq.s32.totalorder %v315, %v304
        %vm339 = vcmp.eq.s32.totalorder %v315, %v305
        %vm340 = vcmp.eq.s32.totalorder %v315, %v306
        %vm341 = vcmp.eq.s32.totalorder %v315, %v307
        %vm342 = vcmp.eq.s32.totalorder %v315, %v308
        %vm343 = vcmp.eq.s32.totalorder %v315, %v309
        %vm344 = vcmp.eq.s32.totalorder %v315, %v310
        %vm345 = vcmp.eq.s32.totalorder %v315, %v311
        %vm346 = vcmp.eq.s32.totalorder %v315, %v312
        %vm347 = vcmp.eq.s32.totalorder %v315, %v313
        %v348 = vsel %vm316, 1, 0
        %v349 = vsel %vm317, 1, 0
        %v350 = vsel %vm318, 1, 0
        %v351 = vsel %vm319, 1, 0
        %v352 = vsel %vm320, 1, 0
        %v353 = vsel %vm321, 1, 0
        %v354 = vsel %vm322, 1, 0
        %v355 = vsel %vm323, 1, 0
        %v356 = vsel %vm324, 1, 0
        %v357 = vsel %vm325, 1, 0
        %v358 = vsel %vm326, 1, 0
        %v359 = vsel %vm327, 1, 0
        %v360 = vsel %vm328, 1, 0
        %v361 = vsel %vm329, 1, 0
        %v362 = vsel %vm330, 1, 0
        %v363 = vsel %vm331, 1, 0
        %v364 = vsel %vm332, 1, 0
        %v365 = vsel %vm333, 1, 0
        %v366 = vsel %vm334, 1, 0
        %v367 = vsel %vm335, 1, 0
        %v368 = vsel %vm336, 1, 0
        %v369 = vsel %vm337, 1, 0
        %v370 = vsel %vm338, 1, 0
        %v371 = vsel %vm339, 1, 0
        %v372 = vsel %vm340, 1, 0
        %v373 = vsel %vm341, 1, 0
        %v374 = vsel %vm342, 1, 0
        %v375 = vsel %vm343, 1, 0
        %v376 = vsel %vm344, 1, 0
        %v377 = vsel %vm345, 1, 0
        %v378 = vsel %vm346, 1, 0
        %v379 = vsel %vm347, 1, 0
        %v380 = vcvt.s32.f32 %v348
        %v381 = vcvt.s32.f32 %v349
        %v382 = vcvt.s32.f32 %v350
        %v383 = vcvt.s32.f32 %v351
        %v384 = vcvt.s32.f32 %v352
        %v385 = vcvt.s32.f32 %v353
        %v386 = vcvt.s32.f32 %v354
        %v387 = vcvt.s32.f32 %v355
        %v388 = vcvt.s32.f32 %v356
        %v389 = vcvt.s32.f32 %v357
        %v390 = vcvt.s32.f32 %v358
        %v391 = vcvt.s32.f32 %v359
        %v392 = vcvt.s32.f32 %v360
        %v393 = vcvt.s32.f32 %v361
        %v394 = vcvt.s32.f32 %v362
        %v395 = vcvt.s32.f32 %v363
        %v396 = vcvt.s32.f32 %v364
        %v397 = vcvt.s32.f32 %v365
        %v398 = vcvt.s32.f32 %v366
        %v399 = vcvt.s32.f32 %v367
        %v400 = vcvt.s32.f32 %v368
        %v401 = vcvt.s32.f32 %v369
        %v402 = vcvt.s32.f32 %v370
        %v403 = vcvt.s32.f32 %v371
        %v404 = vcvt.s32.f32 %v372
        %v405 = vcvt.s32.f32 %v373
        %v406 = vcvt.s32.f32 %v374
        %v407 = vcvt.s32.f32 %v375
        %v408 = vcvt.s32.f32 %v376
        %v409 = vcvt.s32.f32 %v377
        %v410 = vcvt.s32.f32 %v378
        %v411 = vcvt.s32.f32 %v379
        %v413 = vperm.slane %v246, 0
        %v414 = vperm.slane %v246, 1
        %417 = vmatpush.msra.mxu0 %v395
        %418 = vmatpush.msra.mxu0 %v394
        %419 = vmatpush.msra.mxu0 %v393
        %420 = vmatpush.msra.mxu0 %v392
        %421 = vmatpush.msra.mxu0 %v391
        %422 = vmatpush.msra.mxu0 %v390
        %423 = vmatpush.msra.mxu0 %v389
        %424 = vmatpush.msra.mxu0 %v388
        %425 = vmatpush.msra.mxu0 %v387
        %426 = vmatpush.msra.mxu0 %v386
        %427 = vmatpush.msra.mxu0 %v385
        %428 = vmatpush.msra.mxu0 %v384
        %429 = vmatpush.msra.mxu0 %v383
        %430 = vmatpush.msra.mxu0 %v382
        %431 = vmatpush.msra.mxu0 %v381
        %432 = vmatpush.msra.mxu0 %v380
        %433 = vmatmul.f32.gmra.mxu0 %v413
        %v434 = vpop.f32.mrf.mxu0
        %v435 = vadd.f32 0.0, %v434
        %436 = vdwg.mxu0
        %437 = vmatpush.msra.mxu0 %v411
        %438 = vmatpush.msra.mxu0 %v410
        %439 = vmatpush.msra.mxu0 %v409
        %440 = vmatpush.msra.mxu0 %v408
        %441 = vmatpush.msra.mxu0 %v407
        %442 = vmatpush.msra.mxu0 %v406
        %443 = vmatpush.msra.mxu0 %v405
        %444 = vmatpush.msra.mxu0 %v404
        %445 = vmatpush.msra.mxu0 %v403
        %446 = vmatpush.msra.mxu0 %v402
        %447 = vmatpush.msra.mxu0 %v401
        %448 = vmatpush.msra.mxu0 %v400
        %449 = vmatpush.msra.mxu0 %v399
        %450 = vmatpush.msra.mxu0 %v398
        %451 = vmatpush.msra.mxu0 %v397
        %452 = vmatpush.msra.mxu0 %v396
        %453 = vmatmul.f32.gmra.mxu0 %v414
        %v454 = vpop.f32.mrf.mxu0
        %v455 = vadd.f32 %v435, %v454
        %456 = vdwg.mxu0
        %v457 = vadd.f32 %v314, %v455
        %v458 = vperm.slane %v245, 1
        %vm459 = vcmp.eq.s32.totalorder %v458, %v282
        %vm460 = vcmp.eq.s32.totalorder %v458, %v283
        %vm461 = vcmp.eq.s32.totalorder %v458, %v284
        %vm462 = vcmp.eq.s32.totalorder %v458, %v285
        %vm463 = vcmp.eq.s32.totalorder %v458, %v286
        %vm464 = vcmp.eq.s32.totalorder %v458, %v287
        %vm465 = vcmp.eq.s32.totalorder %v458, %v288
        %vm466 = vcmp.eq.s32.totalorder %v458, %v289
        %vm467 = vcmp.eq.s32.totalorder %v458, %v290
        %vm468 = vcmp.eq.s32.totalorder %v458, %v291
        %vm469 = vcmp.eq.s32.totalorder %v458, %v292
        %vm470 = vcmp.eq.s32.totalorder %v458, %v293
        %vm471 = vcmp.eq.s32.totalorder %v458, %v294
        %vm472 = vcmp.eq.s32.totalorder %v458, %v295
        %vm473 = vcmp.eq.s32.totalorder %v458, %v296
        %vm474 = vcmp.eq.s32.totalorder %v458, %v297
        %vm475 = vcmp.eq.s32.totalorder %v458, %v298
        %vm476 = vcmp.eq.s32.totalorder %v458, %v299
        %vm477 = vcmp.eq.s32.totalorder %v458, %v300
        %vm478 = vcmp.eq.s32.totalorder %v458, %v301
        %vm479 = vcmp.eq.s32.totalorder %v458, %v302
        %vm480 = vcmp.eq.s32.totalorder %v458, %v303
        %vm481 = vcmp.eq.s32.totalorder %v458, %v304
        %vm482 = vcmp.eq.s32.totalorder %v458, %v305
        %vm483 = vcmp.eq.s32.totalorder %v458, %v306
        %vm484 = vcmp.eq.s32.totalorder %v458, %v307
        %vm485 = vcmp.eq.s32.totalorder %v458, %v308
        %vm486 = vcmp.eq.s32.totalorder %v458, %v309
        %vm487 = vcmp.eq.s32.totalorder %v458, %v310
        %vm488 = vcmp.eq.s32.totalorder %v458, %v311
        %vm489 = vcmp.eq.s32.totalorder %v458, %v312
        %vm490 = vcmp.eq.s32.totalorder %v458, %v313
        %v491 = vsel %vm459, 1, 0
        %v492 = vsel %vm460, 1, 0
        %v493 = vsel %vm461, 1, 0
        %v494 = vsel %vm462, 1, 0
        %v495 = vsel %vm463, 1, 0
        %v496 = vsel %vm464, 1, 0
        %v497 = vsel %vm465, 1, 0
        %v498 = vsel %vm466, 1, 0
        %v499 = vsel %vm467, 1, 0
        %v500 = vsel %vm468, 1, 0
        %v501 = vsel %vm469, 1, 0
        %v502 = vsel %vm470, 1, 0
        %v503 = vsel %vm471, 1, 0
        %v504 = vsel %vm472, 1, 0
        %v505 = vsel %vm473, 1, 0
        %v506 = vsel %vm474, 1, 0
        %v507 = vsel %vm475, 1, 0
        %v508 = vsel %vm476, 1, 0
        %v509 = vsel %vm477, 1, 0
        %v510 = vsel %vm478, 1, 0
        %v511 = vsel %vm479, 1, 0
        %v512 = vsel %vm480, 1, 0
        %v513 = vsel %vm481, 1, 0
        %v514 = vsel %vm482, 1, 0
        %v515 = vsel %vm483, 1, 0
        %v516 = vsel %vm484, 1, 0
        %v517 = vsel %vm485, 1, 0
        %v518 = vsel %vm486, 1, 0
        %v519 = vsel %vm487, 1, 0
        %v520 = vsel %vm488, 1, 0
        %v521 = vsel %vm489, 1, 0
        %v522 = vsel %vm490, 1, 0
        %v523 = vcvt.s32.f32 %v491
        %v524 = vcvt.s32.f32 %v492
        %v525 = vcvt.s32.f32 %v493
        %v526 = vcvt.s32.f32 %v494
        %v527 = vcvt.s32.f32 %v495
        %v528 = vcvt.s32.f32 %v496
        %v529 = vcvt.s32.f32 %v497
        %v530 = vcvt.s32.f32 %v498
        %v531 = vcvt.s32.f32 %v499
        %v532 = vcvt.s32.f32 %v500
        %v533 = vcvt.s32.f32 %v501
        %v534 = vcvt.s32.f32 %v502
        %v535 = vcvt.s32.f32 %v503
        %v536 = vcvt.s32.f32 %v504
        %v537 = vcvt.s32.f32 %v505
        %v538 = vcvt.s32.f32 %v506
        %v539 = vcvt.s32.f32 %v507
        %v540 = vcvt.s32.f32 %v508
        %v541 = vcvt.s32.f32 %v509
        %v542 = vcvt.s32.f32 %v510
        %v543 = vcvt.s32.f32 %v511
        %v544 = vcvt.s32.f32 %v512
        %v545 = vcvt.s32.f32 %v513
        %v546 = vcvt.s32.f32 %v514
        %v547 = vcvt.s32.f32 %v515
        %v548 = vcvt.s32.f32 %v516
        %v549 = vcvt.s32.f32 %v517
        %v550 = vcvt.s32.f32 %v518
        %v551 = vcvt.s32.f32 %v519
        %v552 = vcvt.s32.f32 %v520
        %v553 = vcvt.s32.f32 %v521
        %v554 = vcvt.s32.f32 %v522
        %555 = vmatpush.msra.mxu0 %v538
        %556 = vmatpush.msra.mxu0 %v537
        %557 = vmatpush.msra.mxu0 %v536
        %558 = vmatpush.msra.mxu0 %v535
        %559 = vmatpush.msra.mxu0 %v534
        %560 = vmatpush.msra.mxu0 %v533
        %561 = vmatpush.msra.mxu0 %v532
        %562 = vmatpush.msra.mxu0 %v531
        %563 = vmatpush.msra.mxu0 %v530
        %564 = vmatpush.msra.mxu0 %v529
        %565 = vmatpush.msra.mxu0 %v528
        %566 = vmatpush.msra.mxu0 %v527
        %567 = vmatpush.msra.mxu0 %v526
        %568 = vmatpush.msra.mxu0 %v525
        %569 = vmatpush.msra.mxu0 %v524
        %570 = vmatpush.msra.mxu0 %v523
        %571 = vmatmul.f32.gmra.mxu0 %v413
        %v572 = vpop.f32.mrf.mxu0
        %v573 = vadd.f32 0.0, %v572
        %574 = vdwg.mxu0
        %575 = vmatpush.msra.mxu0 %v554
        %576 = vmatpush.msra.mxu0 %v553
        %577 = vmatpush.msra.mxu0 %v552
        %578 = vmatpush.msra.mxu0 %v551
        %579 = vmatpush.msra.mxu0 %v550
        %580 = vmatpush.msra.mxu0 %v549
        %581 = vmatpush.msra.mxu0 %v548
        %582 = vmatpush.msra.mxu0 %v547
        %583 = vmatpush.msra.mxu0 %v546
        %584 = vmatpush.msra.mxu0 %v545
        %585 = vmatpush.msra.mxu0 %v544
        %586 = vmatpush.msra.mxu0 %v543
        %587 = vmatpush.msra.mxu0 %v542
        %588 = vmatpush.msra.mxu0 %v541
        %589 = vmatpush.msra.mxu0 %v540
        %590 = vmatpush.msra.mxu0 %v539
        %591 = vmatmul.f32.gmra.mxu0 %v414
        %v592 = vpop.f32.mrf.mxu0
        %v593 = vadd.f32 %v573, %v592
        %594 = vdwg.mxu0
        %v595 = vadd.f32 %v457, %v593
        %v596 = vperm.slane %v245, 2
        %vm597 = vcmp.eq.s32.totalorder %v596, %v282
        %vm598 = vcmp.eq.s32.totalorder %v596, %v283
        %vm599 = vcmp.eq.s32.totalorder %v596, %v284
        %vm600 = vcmp.eq.s32.totalorder %v596, %v285
        %vm601 = vcmp.eq.s32.totalorder %v596, %v286
        %vm602 = vcmp.eq.s32.totalorder %v596, %v287
        %vm603 = vcmp.eq.s32.totalorder %v596, %v288
        %vm604 = vcmp.eq.s32.totalorder %v596, %v289
        %vm605 = vcmp.eq.s32.totalorder %v596, %v290
        %vm606 = vcmp.eq.s32.totalorder %v596, %v291
        %vm607 = vcmp.eq.s32.totalorder %v596, %v292
        %vm608 = vcmp.eq.s32.totalorder %v596, %v293
        %vm609 = vcmp.eq.s32.totalorder %v596, %v294
        %vm610 = vcmp.eq.s32.totalorder %v596, %v295
        %vm611 = vcmp.eq.s32.totalorder %v596, %v296
        %vm612 = vcmp.eq.s32.totalorder %v596, %v297
        %vm613 = vcmp.eq.s32.totalorder %v596, %v298
        %vm614 = vcmp.eq.s32.totalorder %v596, %v299
        %vm615 = vcmp.eq.s32.totalorder %v596, %v300
        %vm616 = vcmp.eq.s32.totalorder %v596, %v301
        %vm617 = vcmp.eq.s32.totalorder %v596, %v302
        %vm618 = vcmp.eq.s32.totalorder %v596, %v303
        %vm619 = vcmp.eq.s32.totalorder %v596, %v304
        %vm620 = vcmp.eq.s32.totalorder %v596, %v305
        %vm621 = vcmp.eq.s32.totalorder %v596, %v306
        %vm622 = vcmp.eq.s32.totalorder %v596, %v307
        %vm623 = vcmp.eq.s32.totalorder %v596, %v308
        %vm624 = vcmp.eq.s32.totalorder %v596, %v309
        %vm625 = vcmp.eq.s32.totalorder %v596, %v310
        %vm626 = vcmp.eq.s32.totalorder %v596, %v311
        %vm627 = vcmp.eq.s32.totalorder %v596, %v312
        %vm628 = vcmp.eq.s32.totalorder %v596, %v313
        %v629 = vsel %vm597, 1, 0
        %v630 = vsel %vm598, 1, 0
        %v631 = vsel %vm599, 1, 0
        %v632 = vsel %vm600, 1, 0
        %v633 = vsel %vm601, 1, 0
        %v634 = vsel %vm602, 1, 0
        %v635 = vsel %vm603, 1, 0
        %v636 = vsel %vm604, 1, 0
        %v637 = vsel %vm605, 1, 0
        %v638 = vsel %vm606, 1, 0
        %v639 = vsel %vm607, 1, 0
        %v640 = vsel %vm608, 1, 0
        %v641 = vsel %vm609, 1, 0
        %v642 = vsel %vm610, 1, 0
        %v643 = vsel %vm611, 1, 0
        %v644 = vsel %vm612, 1, 0
        %v645 = vsel %vm613, 1, 0
        %v646 = vsel %vm614, 1, 0
        %v647 = vsel %vm615, 1, 0
        %v648 = vsel %vm616, 1, 0
        %v649 = vsel %vm617, 1, 0
        %v650 = vsel %vm618, 1, 0
        %v651 = vsel %vm619, 1, 0
        %v652 = vsel %vm620, 1, 0
        %v653 = vsel %vm621, 1, 0
        %v654 = vsel %vm622, 1, 0
        %v655 = vsel %vm623, 1, 0
        %v656 = vsel %vm624, 1, 0
        %v657 = vsel %vm625, 1, 0
        %v658 = vsel %vm626, 1, 0
        %v659 = vsel %vm627, 1, 0
        %v660 = vsel %vm628, 1, 0
        %v661 = vcvt.s32.f32 %v629
        %v662 = vcvt.s32.f32 %v630
        %v663 = vcvt.s32.f32 %v631
        %v664 = vcvt.s32.f32 %v632
        %v665 = vcvt.s32.f32 %v633
        %v666 = vcvt.s32.f32 %v634
        %v667 = vcvt.s32.f32 %v635
        %v668 = vcvt.s32.f32 %v636
        %v669 = vcvt.s32.f32 %v637
        %v670 = vcvt.s32.f32 %v638
        %v671 = vcvt.s32.f32 %v639
        %v672 = vcvt.s32.f32 %v640
        %v673 = vcvt.s32.f32 %v641
        %v674 = vcvt.s32.f32 %v642
        %v675 = vcvt.s32.f32 %v643
        %v676 = vcvt.s32.f32 %v644
        %v677 = vcvt.s32.f32 %v645
        %v678 = vcvt.s32.f32 %v646
        %v679 = vcvt.s32.f32 %v647
        %v680 = vcvt.s32.f32 %v648
        %v681 = vcvt.s32.f32 %v649
        %v682 = vcvt.s32.f32 %v650
        %v683 = vcvt.s32.f32 %v651
        %v684 = vcvt.s32.f32 %v652
        %v685 = vcvt.s32.f32 %v653
        %v686 = vcvt.s32.f32 %v654
        %v687 = vcvt.s32.f32 %v655
        %v688 = vcvt.s32.f32 %v656
        %v689 = vcvt.s32.f32 %v657
        %v690 = vcvt.s32.f32 %v658
        %v691 = vcvt.s32.f32 %v659
        %v692 = vcvt.s32.f32 %v660
        %693 = vmatpush.msra.mxu0 %v676
        %694 = vmatpush.msra.mxu0 %v675
        %695 = vmatpush.msra.mxu0 %v674
        %696 = vmatpush.msra.mxu0 %v673
        %697 = vmatpush.msra.mxu0 %v672
        %698 = vmatpush.msra.mxu0 %v671
        %699 = vmatpush.msra.mxu0 %v670
        %700 = vmatpush.msra.mxu0 %v669
        %701 = vmatpush.msra.mxu0 %v668
        %702 = vmatpush.msra.mxu0 %v667
        %703 = vmatpush.msra.mxu0 %v666
        %704 = vmatpush.msra.mxu0 %v665
        %705 = vmatpush.msra.mxu0 %v664
        %706 = vmatpush.msra.mxu0 %v663
        %707 = vmatpush.msra.mxu0 %v662
        %708 = vmatpush.msra.mxu0 %v661
        %709 = vmatmul.f32.gmra.mxu0 %v413
        %v710 = vpop.f32.mrf.mxu0
        %v711 = vadd.f32 0.0, %v710
        %712 = vdwg.mxu0
        %713 = vmatpush.msra.mxu0 %v692
        %714 = vmatpush.msra.mxu0 %v691
        %715 = vmatpush.msra.mxu0 %v690
        %716 = vmatpush.msra.mxu0 %v689
        %717 = vmatpush.msra.mxu0 %v688
        %718 = vmatpush.msra.mxu0 %v687
        %719 = vmatpush.msra.mxu0 %v686
        %720 = vmatpush.msra.mxu0 %v685
        %721 = vmatpush.msra.mxu0 %v684
        %722 = vmatpush.msra.mxu0 %v683
        %723 = vmatpush.msra.mxu0 %v682
        %724 = vmatpush.msra.mxu0 %v681
        %725 = vmatpush.msra.mxu0 %v680
        %726 = vmatpush.msra.mxu0 %v679
        %727 = vmatpush.msra.mxu0 %v678
        %728 = vmatpush.msra.mxu0 %v677
        %729 = vmatmul.f32.gmra.mxu0 %v414
        %v730 = vpop.f32.mrf.mxu0
        %v731 = vadd.f32 %v711, %v730
        %732 = vdwg.mxu0
        %v733 = vadd.f32 %v595, %v731
        %v734 = vperm.slane %v245, 3
        %vm735 = vcmp.eq.s32.totalorder %v734, %v282
        %vm736 = vcmp.eq.s32.totalorder %v734, %v283
        %vm737 = vcmp.eq.s32.totalorder %v734, %v284
        %vm738 = vcmp.eq.s32.totalorder %v734, %v285
        %vm739 = vcmp.eq.s32.totalorder %v734, %v286
        %vm740 = vcmp.eq.s32.totalorder %v734, %v287
        %vm741 = vcmp.eq.s32.totalorder %v734, %v288
        %vm742 = vcmp.eq.s32.totalorder %v734, %v289
        %vm743 = vcmp.eq.s32.totalorder %v734, %v290
        %vm744 = vcmp.eq.s32.totalorder %v734, %v291
        %vm745 = vcmp.eq.s32.totalorder %v734, %v292
        %vm746 = vcmp.eq.s32.totalorder %v734, %v293
        %vm747 = vcmp.eq.s32.totalorder %v734, %v294
        %vm748 = vcmp.eq.s32.totalorder %v734, %v295
        %vm749 = vcmp.eq.s32.totalorder %v734, %v296
        %vm750 = vcmp.eq.s32.totalorder %v734, %v297
        %vm751 = vcmp.eq.s32.totalorder %v734, %v298
        %vm752 = vcmp.eq.s32.totalorder %v734, %v299
        %vm753 = vcmp.eq.s32.totalorder %v734, %v300
        %vm754 = vcmp.eq.s32.totalorder %v734, %v301
        %vm755 = vcmp.eq.s32.totalorder %v734, %v302
        %vm756 = vcmp.eq.s32.totalorder %v734, %v303
        %vm757 = vcmp.eq.s32.totalorder %v734, %v304
        %vm758 = vcmp.eq.s32.totalorder %v734, %v305
        %vm759 = vcmp.eq.s32.totalorder %v734, %v306
        %vm760 = vcmp.eq.s32.totalorder %v734, %v307
        %vm761 = vcmp.eq.s32.totalorder %v734, %v308
        %vm762 = vcmp.eq.s32.totalorder %v734, %v309
        %vm763 = vcmp.eq.s32.totalorder %v734, %v310
        %vm764 = vcmp.eq.s32.totalorder %v734, %v311
        %vm765 = vcmp.eq.s32.totalorder %v734, %v312
        %vm766 = vcmp.eq.s32.totalorder %v734, %v313
        %v767 = vsel %vm735, 1, 0
        %v768 = vsel %vm736, 1, 0
        %v769 = vsel %vm737, 1, 0
        %v770 = vsel %vm738, 1, 0
        %v771 = vsel %vm739, 1, 0
        %v772 = vsel %vm740, 1, 0
        %v773 = vsel %vm741, 1, 0
        %v774 = vsel %vm742, 1, 0
        %v775 = vsel %vm743, 1, 0
        %v776 = vsel %vm744, 1, 0
        %v777 = vsel %vm745, 1, 0
        %v778 = vsel %vm746, 1, 0
        %v779 = vsel %vm747, 1, 0
        %v780 = vsel %vm748, 1, 0
        %v781 = vsel %vm749, 1, 0
        %v782 = vsel %vm750, 1, 0
        %v783 = vsel %vm751, 1, 0
        %v784 = vsel %vm752, 1, 0
        %v785 = vsel %vm753, 1, 0
        %v786 = vsel %vm754, 1, 0
        %v787 = vsel %vm755, 1, 0
        %v788 = vsel %vm756, 1, 0
        %v789 = vsel %vm757, 1, 0
        %v790 = vsel %vm758, 1, 0
        %v791 = vsel %vm759, 1, 0
        %v792 = vsel %vm760, 1, 0
        %v793 = vsel %vm761, 1, 0
        %v794 = vsel %vm762, 1, 0
        %v795 = vsel %vm763, 1, 0
        %v796 = vsel %vm764, 1, 0
        %v797 = vsel %vm765, 1, 0
        %v798 = vsel %vm766, 1, 0
        %v799 = vcvt.s32.f32 %v767
        %v800 = vcvt.s32.f32 %v768
        %v801 = vcvt.s32.f32 %v769
        %v802 = vcvt.s32.f32 %v770
        %v803 = vcvt.s32.f32 %v771
        %v804 = vcvt.s32.f32 %v772
        %v805 = vcvt.s32.f32 %v773
        %v806 = vcvt.s32.f32 %v774
        %v807 = vcvt.s32.f32 %v775
        %v808 = vcvt.s32.f32 %v776
        %v809 = vcvt.s32.f32 %v777
        %v810 = vcvt.s32.f32 %v778
        %v811 = vcvt.s32.f32 %v779
        %v812 = vcvt.s32.f32 %v780
        %v813 = vcvt.s32.f32 %v781
        %v814 = vcvt.s32.f32 %v782
        %v815 = vcvt.s32.f32 %v783
        %v816 = vcvt.s32.f32 %v784
        %v817 = vcvt.s32.f32 %v785
        %v818 = vcvt.s32.f32 %v786
        %v819 = vcvt.s32.f32 %v787
        %v820 = vcvt.s32.f32 %v788
        %v821 = vcvt.s32.f32 %v789
        %v822 = vcvt.s32.f32 %v790
        %v823 = vcvt.s32.f32 %v791
        %v824 = vcvt.s32.f32 %v792
        %v825 = vcvt.s32.f32 %v793
        %v826 = vcvt.s32.f32 %v794
        %v827 = vcvt.s32.f32 %v795
        %v828 = vcvt.s32.f32 %v796
        %v829 = vcvt.s32.f32 %v797
        %v830 = vcvt.s32.f32 %v798
        %831 = vmatpush.msra.mxu0 %v814
        %832 = vmatpush.msra.mxu0 %v813
        %833 = vmatpush.msra.mxu0 %v812
        %834 = vmatpush.msra.mxu0 %v811
        %835 = vmatpush.msra.mxu0 %v810
        %836 = vmatpush.msra.mxu0 %v809
        %837 = vmatpush.msra.mxu0 %v808
        %838 = vmatpush.msra.mxu0 %v807
        %839 = vmatpush.msra.mxu0 %v806
        %840 = vmatpush.msra.mxu0 %v805
        %841 = vmatpush.msra.mxu0 %v804
        %842 = vmatpush.msra.mxu0 %v803
        %843 = vmatpush.msra.mxu0 %v802
        %844 = vmatpush.msra.mxu0 %v801
        %845 = vmatpush.msra.mxu0 %v800
        %846 = vmatpush.msra.mxu0 %v799
        %847 = vmatmul.f32.gmra.mxu0 %v413
        %v848 = vpop.f32.mrf.mxu0
        %v849 = vadd.f32 0.0, %v848
        %850 = vdwg.mxu0
        %851 = vmatpush.msra.mxu0 %v830
        %852 = vmatpush.msra.mxu0 %v829
        %853 = vmatpush.msra.mxu0 %v828
        %854 = vmatpush.msra.mxu0 %v827
        %855 = vmatpush.msra.mxu0 %v826
        %856 = vmatpush.msra.mxu0 %v825
        %857 = vmatpush.msra.mxu0 %v824
        %858 = vmatpush.msra.mxu0 %v823
        %859 = vmatpush.msra.mxu0 %v822
        %860 = vmatpush.msra.mxu0 %v821
        %861 = vmatpush.msra.mxu0 %v820
        %862 = vmatpush.msra.mxu0 %v819
        %863 = vmatpush.msra.mxu0 %v818
        %864 = vmatpush.msra.mxu0 %v817
        %865 = vmatpush.msra.mxu0 %v816
        %866 = vmatpush.msra.mxu0 %v815
        %867 = vmatmul.f32.gmra.mxu0 %v414
        %v868 = vpop.f32.mrf.mxu0
        %v869 = vadd.f32 %v849, %v868
        %870 = vdwg.mxu0
        %v871 = vadd.f32 %v733, %v869
        %v872 = vperm.slane %v245, 4
        %vm873 = vcmp.eq.s32.totalorder %v872, %v282
        %vm874 = vcmp.eq.s32.totalorder %v872, %v283
        %vm875 = vcmp.eq.s32.totalorder %v872, %v284
        %vm876 = vcmp.eq.s32.totalorder %v872, %v285
        %vm877 = vcmp.eq.s32.totalorder %v872, %v286
        %vm878 = vcmp.eq.s32.totalorder %v872, %v287
        %vm879 = vcmp.eq.s32.totalorder %v872, %v288
        %vm880 = vcmp.eq.s32.totalorder %v872, %v289
        %vm881 = vcmp.eq.s32.totalorder %v872, %v290
        %vm882 = vcmp.eq.s32.totalorder %v872, %v291
        %vm883 = vcmp.eq.s32.totalorder %v872, %v292
        %vm884 = vcmp.eq.s32.totalorder %v872, %v293
        %vm885 = vcmp.eq.s32.totalorder %v872, %v294
        %vm886 = vcmp.eq.s32.totalorder %v872, %v295
        %vm887 = vcmp.eq.s32.totalorder %v872, %v296
        %vm888 = vcmp.eq.s32.totalorder %v872, %v297
        %vm889 = vcmp.eq.s32.totalorder %v872, %v298
        %vm890 = vcmp.eq.s32.totalorder %v872, %v299
        %vm891 = vcmp.eq.s32.totalorder %v872, %v300
        %vm892 = vcmp.eq.s32.totalorder %v872, %v301
        %vm893 = vcmp.eq.s32.totalorder %v872, %v302
        %vm894 = vcmp.eq.s32.totalorder %v872, %v303
        %vm895 = vcmp.eq.s32.totalorder %v872, %v304
        %vm896 = vcmp.eq.s32.totalorder %v872, %v305
        %vm897 = vcmp.eq.s32.totalorder %v872, %v306
        %vm898 = vcmp.eq.s32.totalorder %v872, %v307
        %vm899 = vcmp.eq.s32.totalorder %v872, %v308
        %vm900 = vcmp.eq.s32.totalorder %v872, %v309
        %vm901 = vcmp.eq.s32.totalorder %v872, %v310
        %vm902 = vcmp.eq.s32.totalorder %v872, %v311
        %vm903 = vcmp.eq.s32.totalorder %v872, %v312
        %vm904 = vcmp.eq.s32.totalorder %v872, %v313
        %v905 = vsel %vm873, 1, 0
        %v906 = vsel %vm874, 1, 0
        %v907 = vsel %vm875, 1, 0
        %v908 = vsel %vm876, 1, 0
        %v909 = vsel %vm877, 1, 0
        %v910 = vsel %vm878, 1, 0
        %v911 = vsel %vm879, 1, 0
        %v912 = vsel %vm880, 1, 0
        %v913 = vsel %vm881, 1, 0
        %v914 = vsel %vm882, 1, 0
        %v915 = vsel %vm883, 1, 0
        %v916 = vsel %vm884, 1, 0
        %v917 = vsel %vm885, 1, 0
        %v918 = vsel %vm886, 1, 0
        %v919 = vsel %vm887, 1, 0
        %v920 = vsel %vm888, 1, 0
        %v921 = vsel %vm889, 1, 0
        %v922 = vsel %vm890, 1, 0
        %v923 = vsel %vm891, 1, 0
        %v924 = vsel %vm892, 1, 0
        %v925 = vsel %vm893, 1, 0
        %v926 = vsel %vm894, 1, 0
        %v927 = vsel %vm895, 1, 0
        %v928 = vsel %vm896, 1, 0
        %v929 = vsel %vm897, 1, 0
        %v930 = vsel %vm898, 1, 0
        %v931 = vsel %vm899, 1, 0
        %v932 = vsel %vm900, 1, 0
        %v933 = vsel %vm901, 1, 0
        %v934 = vsel %vm902, 1, 0
        %v935 = vsel %vm903, 1, 0
        %v936 = vsel %vm904, 1, 0
        %v937 = vcvt.s32.f32 %v905
        %v938 = vcvt.s32.f32 %v906
        %v939 = vcvt.s32.f32 %v907
        %v940 = vcvt.s32.f32 %v908
        %v941 = vcvt.s32.f32 %v909
        %v942 = vcvt.s32.f32 %v910
        %v943 = vcvt.s32.f32 %v911
        %v944 = vcvt.s32.f32 %v912
        %v945 = vcvt.s32.f32 %v913
        %v946 = vcvt.s32.f32 %v914
        %v947 = vcvt.s32.f32 %v915
        %v948 = vcvt.s32.f32 %v916
        %v949 = vcvt.s32.f32 %v917
        %v950 = vcvt.s32.f32 %v918
        %v951 = vcvt.s32.f32 %v919
        %v952 = vcvt.s32.f32 %v920
        %v953 = vcvt.s32.f32 %v921
        %v954 = vcvt.s32.f32 %v922
        %v955 = vcvt.s32.f32 %v923
        %v956 = vcvt.s32.f32 %v924
        %v957 = vcvt.s32.f32 %v925
        %v958 = vcvt.s32.f32 %v926
        %v959 = vcvt.s32.f32 %v927
        %v960 = vcvt.s32.f32 %v928
        %v961 = vcvt.s32.f32 %v929
        %v962 = vcvt.s32.f32 %v930
        %v963 = vcvt.s32.f32 %v931
        %v964 = vcvt.s32.f32 %v932
        %v965 = vcvt.s32.f32 %v933
        %v966 = vcvt.s32.f32 %v934
        %v967 = vcvt.s32.f32 %v935
        %v968 = vcvt.s32.f32 %v936
        %969 = vmatpush.msra.mxu0 %v952
        %970 = vmatpush.msra.mxu0 %v951
        %971 = vmatpush.msra.mxu0 %v950
        %972 = vmatpush.msra.mxu0 %v949
        %973 = vmatpush.msra.mxu0 %v948
        %974 = vmatpush.msra.mxu0 %v947
        %975 = vmatpush.msra.mxu0 %v946
        %976 = vmatpush.msra.mxu0 %v945
        %977 = vmatpush.msra.mxu0 %v944
        %978 = vmatpush.msra.mxu0 %v943
        %979 = vmatpush.msra.mxu0 %v942
        %980 = vmatpush.msra.mxu0 %v941
        %981 = vmatpush.msra.mxu0 %v940
        %982 = vmatpush.msra.mxu0 %v939
        %983 = vmatpush.msra.mxu0 %v938
        %984 = vmatpush.msra.mxu0 %v937
        %985 = vmatmul.f32.gmra.mxu0 %v413
        %v986 = vpop.f32.mrf.mxu0
        %v987 = vadd.f32 0.0, %v986
        %988 = vdwg.mxu0
        %989 = vmatpush.msra.mxu0 %v968
        %990 = vmatpush.msra.mxu0 %v967
        %991 = vmatpush.msra.mxu0 %v966
        %992 = vmatpush.msra.mxu0 %v965
        %993 = vmatpush.msra.mxu0 %v964
        %994 = vmatpush.msra.mxu0 %v963
        %995 = vmatpush.msra.mxu0 %v962
        %996 = vmatpush.msra.mxu0 %v961
        %997 = vmatpush.msra.mxu0 %v960
        %998 = vmatpush.msra.mxu0 %v959
        %999 = vmatpush.msra.mxu0 %v958
        %1000 = vmatpush.msra.mxu0 %v957
        %1001 = vmatpush.msra.mxu0 %v956
        %1002 = vmatpush.msra.mxu0 %v955
        %1003 = vmatpush.msra.mxu0 %v954
        %1004 = vmatpush.msra.mxu0 %v953
        %1005 = vmatmul.f32.gmra.mxu0 %v414
        %v1006 = vpop.f32.mrf.mxu0
        %v1007 = vadd.f32 %v987, %v1006
        %1008 = vdwg.mxu0
        %v1009 = vadd.f32 %v871, %v1007
        %1010 = vst [vmem:[#allocation2] sm:$0x1] %v1009
        %p1011 = scmp.eq.s32.totalorder %s29, 1
        // Predicated region
        $region45: #{tpu_custom_call.1} parent=31 // pred_check
          %p1012 = pneg %p1011
        $region46: #{tpu_custom_call.1} parent=31 // pred_check_branch
          %1014 = sbr.rel (%p1012) target = $region48
        $region47: #{tpu_custom_call.1} parent=31 // pred_region
          %v1015 = vld [vmem:[#allocation2] sm:$0x1]
          %s1016 = sld [smem:[#allocation3]]
          %v1017 = vstv %s1016
          %v1018 = vadd.f32 %v1015, %v1017
          %v1019 = vmul.f32 %v1018, 0.5
          %v1020 = vtanh.pop %v1019
          %v1021 = vadd.f32 %v1020, 1.0
          %v1022 = vmul.f32 %v1021, 0.5
          %1023 = vst [vmem:[%s238] sm:$0x1] %v1022
        $region48: #{tpu_custom_call.1} parent=31 // pred_fallthru
          _
        %s1024 = sand.u32 %s117, 1
        %s1025 = scalar_lea.sflag [#allocation6], %s1024
        %s1026 = sand.u32 %s117, 1
        %s1027 = scalar_lea.vmem [#allocation9], %s1026
        // Predicated region
        $region49: #{tpu_custom_call.1} parent=31 // pred_check
          %p1028 = pneg %p127
        $region50: #{tpu_custom_call.1} parent=31 // pred_check_branch
          %1030 = sbr.rel (%p1028) target = $region52
        $region51: #{tpu_custom_call.1} parent=31 // pred_region
          %1032 = vsyncadd %s1025, 0
          %s1033 = scalar_lea.hbm %s3, %s28
          %s1035 = sshll.u32 %s1027, 4
          %s1036 = int_to_ptr.vmem [resolvable:$true] %s1035
          %s1037 = sshll.u32 %s1033, 4
          %s1038 = int_to_ptr.hbm [resolvable:$true] %s1037
          %1040 = dma.vmem_to_hbm [thread:$0]  %s1036, 16, %s1038, %s1025
        $region52: #{tpu_custom_call.1} parent=31 // pred_fallthru
          _
      $region32: #{tpu_custom_call.1} parent=5 // pred_fallthru
        _
      %p1041 = scmp.le.s32.totalorder 2, %s19
      // Predicated region
      $region53: #{tpu_custom_call.1} parent=5 // pred_check
        %p1042 = pneg %p1041
      $region54: #{tpu_custom_call.1} parent=5 // pred_check_branch
        %1044 = sbr.rel (%p1042) target = $region56
      $region55: #{tpu_custom_call.1} parent=5 // pred_region
        %s1045 = ssub.s32 %s19, 2
        // Predicated region
        $region57: #{tpu_custom_call.1} parent=55 // pred_check
          %p1046 = pneg %p133
        $region58: #{tpu_custom_call.1} parent=55 // pred_check_branch
          %1048 = sbr.rel (%p1046) target = $region60
        $region59: #{tpu_custom_call.1} parent=55 // pred_region
          %s1049 = sand.u32 %s118, 1
          %s1050 = scalar_lea.sflag [#allocation6], %s1049
          %s1051 = sand.u32 %s118, 1
          %s1052 = scalar_lea.vmem [#allocation9], %s1051
          %1054 = dma.done %s1050, 16
        $region60: #{tpu_custom_call.1} parent=55 // pred_fallthru
          _
      $region56: #{tpu_custom_call.1} parent=5 // pred_fallthru
        _
    $region6: #{tpu_custom_call.1} parent=1 // loop_footer
      %s23 = sadd.s32 1, %s19
    $region7: #{tpu_custom_call.1} parent=1 // loop_footer_branch
      %18 = sbr.rel target = $region3
    $region8: #{tpu_custom_call.1} parent=1 // loop_exit
      _
    %1055 = vsyncpa [#allocation5], 1
    %s1056 = scalar_lea.sflag [#allocation5], 1
    %1057 = vsyncpa %s1056, 1
    %1058 = vsyncpa [#allocation8], 1
    %s1059 = scalar_lea.sflag [#allocation8], 1
    %1060 = vsyncpa %s1059, 1
    %1061 = vsyncpa [#allocation6], 1
    %s1062 = scalar_lea.sflag [#allocation6], 1
    %1063 = vsyncpa %s1062, 1

</llo_original>
